<compile_context>
chip_gen: v7x
topology: tpu7x:2x2x1
jax: 0.10.0
libtpu: 0.0.40
codegen_flags: <defaults>
</compile_context>

<pallas_src>
import jax
import jax.numpy as jnp
from jax import lax
from jax.experimental import pallas as pl
from jax.experimental.pallas import tpu as pltpu


def basic_block_kernel(x_ref, wb1_ref, b1_ref, wb2_ref, b2_ref,
                       out_ref, xpad_ref, ypad_ref):
    """One lane-packed group of P images per grid step (row layout).

    x_ref    : (H, L)      bf16 input rows, L = P*W*C lanes (P images packed
                           side-by-side along lanes); also provides residual.
    wb*_ref  : (3, L, L)   bf16 banded per-row-tap conv weights with the
                           eval-mode BN scale folded into the output columns,
                           block-diagonal over the P packed images.
    b*_ref   : (1, L)      f32 folded BN shift (beta - mean*scale) per lane.
    out_ref  : (H, L)      f32 output rows.
    xpad/ypad: (H+2, L)    bf16 VMEM scratch: row-padded conv inputs.
    """
    H, L = out_ref.shape

    # Zero only the two 1-row halos; the interior is fully overwritten below.
    # Done every step (not only program_id==0): scratch is per-core and
    # uninitialised when the 'parallel' batch axis is sharded across cores.
    zrow = jnp.zeros((1, L), jnp.bfloat16)
    xpad_ref[0:1, :] = zrow
    xpad_ref[H + 1:H + 2, :] = zrow
    ypad_ref[0:1, :] = zrow
    ypad_ref[H + 1:H + 2, :] = zrow

    def conv3x3(src_pad_ref, wb_ref):
        # 3 MXU matmuls, one per vertical tap; horizontal taps + C_in (+ the
        # lane-packed images) are folded into the banded weights, so K = N = L
        # per dot with f32 accumulation.  Operands are already bf16 — no
        # per-tap casts.
        acc = jnp.dot(src_pad_ref[0:H, :], wb_ref[0],
                      preferred_element_type=jnp.float32)
        for ky in range(1, 3):
            acc = acc + jnp.dot(src_pad_ref[ky:ky + H, :], wb_ref[ky],
                                preferred_element_type=jnp.float32)
        return acc

    x = x_ref[...]                                      # bf16 (H, L)

    # conv1 -> bn1 (scale folded into wb1) -> relu
    xpad_ref[1:1 + H, :] = x
    out1 = jnp.maximum(conv3x3(xpad_ref, wb1_ref) + b1_ref[...], 0.0)

    # conv2 -> bn2 (scale folded into wb2)
    ypad_ref[1:1 + H, :] = out1.astype(jnp.bfloat16)    # single downcast
    out2 = conv3x3(ypad_ref, wb2_ref) + b2_ref[...]

    # residual add + relu (f32)
    out_ref[...] = jnp.maximum(out2 + x.astype(jnp.float32), 0.0)


def _banded_conv_weights(w_hwio, w_img):
    """Fold the horizontal taps + C_in of a 3x3 conv into per-row-tap banded
    matrices.  Returns (3, W*C_in, W*C_out) such that, for a zero row-padded
    input in (H+2, W*C_in) row layout:
        conv_out_rows = sum_ky  rows[ky:ky+H, :] @ band[ky]
    (left/right zero padding is handled by clipping the band at the edges)."""
    kh, kw, cin, cout = w_hwio.shape
    assert (kh, kw) == (3, 3)
    eye_w = jnp.eye(w_img, dtype=w_hwio.dtype)
    bands = []
    for ky in range(3):
        full = jnp.zeros(((w_img + 2) * cin, w_img * cout), w_hwio.dtype)
        for kx in range(3):
            blk = jnp.kron(eye_w, w_hwio[ky, kx])          # (W*Cin, W*Cout)
            full = full + jnp.pad(blk, ((kx * cin, (2 - kx) * cin), (0, 0)))
        bands.append(full[cin:cin + w_img * cin, :])       # clip lane halo
    return jnp.stack(bands)                                # (3, W*Cin, W*Cout)


def basic_block_forward(x_nhwc, w1_hwio, bn1, w2_hwio, bn2, eps=1e-5):
    """x_nhwc: (N, H, W, C) f32.  w*_hwio: (3,3,C,C).  bn*: (gamma,beta,mean,var)."""
    N, H, W, C = x_nhwc.shape
    # Kernel assumptions (stride=1 / no downsample / inplanes==planes / eval BN).
    assert w1_hwio.shape == (3, 3, C, C) and w2_hwio.shape == (3, 3, C, C), (
        "kernel assumes 3x3 convs with inplanes == planes "
        "(stride=1, downsample=None)")
    for bn in (bn1, bn2):
        assert all(p.shape == (C,) for p in bn), "BN params must be per-channel"

    WC = W * C

    # Lane-pack P images per grid step so the last dim is >= 128 lanes
    # (lane-dense stores + better MXU K/N fill).  P must divide N.
    p_desired = min(N, max(1, -(-128 // WC)))
    P = next(p for p in range(p_desired, N + 1) if N % p == 0)
    L = P * WC

    def fold(bn):
        g, b, m, v = bn
        s = g / jnp.sqrt(v + eps)                       # per-channel scale
        return s, b - m * s                             # scale, shift

    s1, sh1 = fold(bn1)
    s2, sh2 = fold(bn2)

    # Fold BN scale into the conv output channels (in f32), build the banded
    # weights, replicate block-diagonally over the P packed images, cast bf16.
    eye_p = jnp.eye(P, dtype=jnp.float32)

    def make_banded(w_hwio, scale):
        w = w_hwio.astype(jnp.float32) * scale.reshape(1, 1, 1, C)
        band = _banded_conv_weights(w, W)                      # (3, WC, WC) f32
        band = jnp.stack([jnp.kron(eye_p, band[ky]) for ky in range(3)])
        return band.astype(jnp.bfloat16)                       # (3, L, L)

    wb1 = make_banded(w1_hwio, s1)
    wb2 = make_banded(w2_hwio, s2)

    # Per-lane BN shift for the (H, L) row layout (lane = p*W*C + w*C + c).
    b1 = jnp.tile(sh1, W * P).reshape(1, L).astype(jnp.float32)
    b2 = jnp.tile(sh2, W * P).reshape(1, L).astype(jnp.float32)

    # NHWC -> lane-packed (N//P, H, P*W*C) bf16 rows (P images side-by-side).
    x_rows = (x_nhwc.reshape(N // P, P, H, WC)
              .transpose(0, 2, 1, 3)
              .reshape(N // P, H, L)
              .astype(jnp.bfloat16))

    # Explicit, generation-aware VMEM budget (fits v7x's 64 MiB parts).
    weight_bytes = 2 * 2 * 3 * L * L * 2       # wb1+wb2, double-buffered, bf16
    bias_bytes = 2 * 2 * L * 4                 # b1+b2, double-buffered, f32
    io_bytes = 2 * H * L * (2 + 4)             # x (bf16) + out (f32), 2 buffers
    scratch_bytes = 2 * (H + 2) * L * 2        # bf16 row-padded scratch
    need = weight_bytes + bias_bytes + io_bytes + scratch_bytes
    vmem_limit = int(min(max(2 * need + (4 << 20), 16 << 20), 64 << 20))
    assert need < (48 << 20), (
        "resident banded weights do not fit VMEM at this width; use a W-tiled "
        "or roll-based K=3C conv formulation instead of the banded one")

    out_rows = pl.pallas_call(
        basic_block_kernel,
        out_shape=jax.ShapeDtypeStruct((N // P, H, L), jnp.float32),
        grid_spec=pltpu.PrefetchScalarGridSpec(
            num_scalar_prefetch=0,
            grid=(N // P,),
            in_specs=[
                pl.BlockSpec((None, H, L), lambda n: (n, 0, 0)),   # x rows
                pl.BlockSpec((3, L, L), lambda n: (0, 0, 0)),      # wb1 (resident)
                pl.BlockSpec((1, L), lambda n: (0, 0)),            # b1  (resident)
                pl.BlockSpec((3, L, L), lambda n: (0, 0, 0)),      # wb2 (resident)
                pl.BlockSpec((1, L), lambda n: (0, 0)),            # b2  (resident)
            ],
            out_specs=pl.BlockSpec((None, H, L), lambda n: (n, 0, 0)),
            scratch_shapes=[pltpu.VMEM((H + 2, L), jnp.bfloat16),  # conv1 padded input
                            pltpu.VMEM((H + 2, L), jnp.bfloat16)], # conv2 padded input
        ),
        compiler_params=pltpu.CompilerParams(
            dimension_semantics=("parallel",),
            vmem_limit_bytes=vmem_limit),
    )(x_rows, wb1, b1, wb2, b2)

    # Unpack lanes back to NHWC.
    return (out_rows.reshape(N // P, H, P, WC)
            .transpose(0, 2, 1, 3)
            .reshape(N, H, W, C))


def reference_forward(x_nhwc, w1_hwio, bn1, w2_hwio, bn2, eps=1e-5):
    """Plain-JAX f32 reference (same eval-mode BN folding)."""
    C = x_nhwc.shape[-1]

    def fold(bn):
        g, b, m, v = bn
        s = g / jnp.sqrt(v + eps)
        return s.reshape(1, 1, 1, C), (b - m * s).reshape(1, 1, 1, C)

    s1, b1 = fold(bn1)
    s2, b2 = fold(bn2)
    dn = lax.conv_dimension_numbers(x_nhwc.shape, w1_hwio.shape,
                                    ('NHWC', 'HWIO', 'NHWC'))
    y = lax.conv_general_dilated(x_nhwc, w1_hwio, (1, 1), 'SAME',
                                 dimension_numbers=dn)
    y = jnp.maximum(y * s1 + b1, 0.0)
    z = lax.conv_general_dilated(y, w2_hwio, (1, 1), 'SAME',
                                 dimension_numbers=dn)
    z = z * s2 + b2
    return jnp.maximum(z + x_nhwc, 0.0)


if __name__ == "__main__":
    # BasicBlock(inplanes=4, planes=4, stride=1, downsample=None)
    N, H, W, C = 4, 16, 16, 4

    key = jax.random.PRNGKey(0)
    k = iter(jax.random.split(key, 12))

    x = jax.random.normal(next(k), (N, H, W, C), dtype=jnp.float32)

    # conv weights in HWIO (3, 3, Cin, Cout)
    w1 = jax.random.normal(next(k), (3, 3, C, C), dtype=jnp.float32) * 0.1
    w2 = jax.random.normal(next(k), (3, 3, C, C), dtype=jnp.float32) * 0.1

    # BatchNorm params (eval mode): gamma, beta, running_mean, running_var
    bn1 = (1.0 + 0.1 * jax.random.normal(next(k), (C,), dtype=jnp.float32),
           0.1 * jax.random.normal(next(k), (C,), dtype=jnp.float32),
           0.1 * jax.random.normal(next(k), (C,), dtype=jnp.float32),
           1.0 + 0.1 * jnp.abs(jax.random.normal(next(k), (C,), dtype=jnp.float32)))
    bn2 = (1.0 + 0.1 * jax.random.normal(next(k), (C,), dtype=jnp.float32),
           0.1 * jax.random.normal(next(k), (C,), dtype=jnp.float32),
           0.1 * jax.random.normal(next(k), (C,), dtype=jnp.float32),
           1.0 + 0.1 * jnp.abs(jax.random.normal(next(k), (C,), dtype=jnp.float32)))

    out = basic_block_forward(x, w1, bn1, w2, bn2)
    out = jax.block_until_ready(out)

    ref = reference_forward(x, w1, bn1, w2, bn2)
    assert out.shape == (N, H, W, C)
    # bf16 MXU inputs (activations + BN-scaled weights) vs. the f32 reference
    # -> loosened tolerance.
    assert jnp.allclose(out, ref, atol=5e-2, rtol=5e-2), "mismatch vs reference"

    print("KERNEL_OK")
</pallas_src>

<mosaic_0001>
module attributes {stable_mosaic.version = 11 : i64} {
  func.func @basic_block_kernel(%arg0: i32, %arg1: memref<1x16x128xbf16, #tpu.memory_space<vmem>>, %arg2: memref<3x128x128xbf16, #tpu.memory_space<vmem>>, %arg3: memref<1x128xf32, #tpu.memory_space<vmem>>, %arg4: memref<3x128x128xbf16, #tpu.memory_space<vmem>>, %arg5: memref<1x128xf32, #tpu.memory_space<vmem>>, %arg6: memref<1x16x128xf32, #tpu.memory_space<vmem>>, %arg7: memref<18x128xbf16, #tpu.memory_space<vmem>>, %arg8: memref<18x128xbf16, #tpu.memory_space<vmem>>) attributes {dimension_semantics = [#tpu.dimension_semantics<parallel>], iteration_bounds = array<i64: 2>, scalar_prefetch = 0 : i64, scratch_operands = 2 : i64, tpu.core_type = #tpu.core_type<tc>, window_params = [{transform_indices = @transform_0, window_bounds = array<i64: 1, 16, 128>}, {pipeline_mode = #tpu.pipeline_mode<synchronous>, transform_indices = @transform_1, window_bounds = array<i64: 3, 128, 128>}, {pipeline_mode = #tpu.pipeline_mode<synchronous>, transform_indices = @transform_2, window_bounds = array<i64: 1, 128>}, {pipeline_mode = #tpu.pipeline_mode<synchronous>, transform_indices = @transform_3, window_bounds = array<i64: 3, 128, 128>}, {pipeline_mode = #tpu.pipeline_mode<synchronous>, transform_indices = @transform_4, window_bounds = array<i64: 1, 128>}, {transform_indices = @transform_5, window_bounds = array<i64: 1, 16, 128>}]} {
    %cst = arith.constant 0.000000e+00 : bf16
    %0 = vector.broadcast %cst : bf16 to vector<1x128xbf16>
    %c0 = arith.constant 0 : index
    %c0_0 = arith.constant 0 : index
    %1 = vector.load %arg7[%c0, %c0_0] : memref<18x128xbf16, #tpu.memory_space<vmem>>, vector<1x128xbf16>
    tpu.vector_store %arg7[%c0, %c0_0], %0 {strides = array<i32>} : memref<18x128xbf16, #tpu.memory_space<vmem>>, vector<1x128xbf16>,
    %c17 = arith.constant 17 : index
    %c0_1 = arith.constant 0 : index
    %2 = vector.load %arg7[%c17, %c0_1] : memref<18x128xbf16, #tpu.memory_space<vmem>>, vector<1x128xbf16>
    tpu.vector_store %arg7[%c17, %c0_1], %0 {strides = array<i32>} : memref<18x128xbf16, #tpu.memory_space<vmem>>, vector<1x128xbf16>,
    %c0_2 = arith.constant 0 : index
    %c0_3 = arith.constant 0 : index
    %3 = vector.load %arg8[%c0_2, %c0_3] : memref<18x128xbf16, #tpu.memory_space<vmem>>, vector<1x128xbf16>
    tpu.vector_store %arg8[%c0_2, %c0_3], %0 {strides = array<i32>} : memref<18x128xbf16, #tpu.memory_space<vmem>>, vector<1x128xbf16>,
    %c17_4 = arith.constant 17 : index
    %c0_5 = arith.constant 0 : index
    %4 = vector.load %arg8[%c17_4, %c0_5] : memref<18x128xbf16, #tpu.memory_space<vmem>>, vector<1x128xbf16>
    tpu.vector_store %arg8[%c17_4, %c0_5], %0 {strides = array<i32>} : memref<18x128xbf16, #tpu.memory_space<vmem>>, vector<1x128xbf16>,
    %c0_6 = arith.constant 0 : index
    %c0_7 = arith.constant 0 : index
    %c0_8 = arith.constant 0 : index
    %5 = vector.load %arg1[%c0_6, %c0_7, %c0_8] : memref<1x16x128xbf16, #tpu.memory_space<vmem>>, vector<1x16x128xbf16>
    %6 = vector.shape_cast %5 : vector<1x16x128xbf16> to vector<16x128xbf16>
    %c1 = arith.constant 1 : index
    %c0_9 = arith.constant 0 : index
    %7 = vector.load %arg7[%c1, %c0_9] : memref<18x128xbf16, #tpu.memory_space<vmem>>, vector<16x128xbf16>
    tpu.vector_store %arg7[%c1, %c0_9], %6 {strides = array<i32>} : memref<18x128xbf16, #tpu.memory_space<vmem>>, vector<16x128xbf16>,
    %c0_10 = arith.constant 0 : index
    %c0_11 = arith.constant 0 : index
    %8 = vector.load %arg7[%c0_10, %c0_11] : memref<18x128xbf16, #tpu.memory_space<vmem>>, vector<16x128xbf16>
    %c0_12 = arith.constant 0 : index
    %c0_13 = arith.constant 0 : index
    %c0_14 = arith.constant 0 : index
    %9 = vector.load %arg2[%c0_12, %c0_13, %c0_14] : memref<3x128x128xbf16, #tpu.memory_space<vmem>>, vector<1x128x128xbf16>
    %10 = vector.shape_cast %9 : vector<1x128x128xbf16> to vector<128x128xbf16>
    %cst_15 = arith.constant dense<0.000000e+00> : vector<16x128xf32>
    %11 = tpu.matmul %8, %10, %cst_15 {dimension_numbers = #tpu.dot_dimension_numbers<[1], [0], [0], [1], [0, 0, 1, 1], [], []>} : vector<16x128xbf16>, vector<128x128xbf16>, vector<16x128xf32> -> vector<16x128xf32>
    %c1_16 = arith.constant 1 : index
    %c0_17 = arith.constant 0 : index
    %12 = vector.load %arg7[%c1_16, %c0_17] : memref<18x128xbf16, #tpu.memory_space<vmem>>, vector<16x128xbf16>
    %c1_18 = arith.constant 1 : index
    %c0_19 = arith.constant 0 : index
    %c0_20 = arith.constant 0 : index
    %13 = vector.load %arg2[%c1_18, %c0_19, %c0_20] : memref<3x128x128xbf16, #tpu.memory_space<vmem>>, vector<1x128x128xbf16>
    %14 = vector.shape_cast %13 : vector<1x128x128xbf16> to vector<128x128xbf16>
    %cst_21 = arith.constant dense<0.000000e+00> : vector<16x128xf32>
    %15 = tpu.matmul %12, %14, %cst_21 {dimension_numbers = #tpu.dot_dimension_numbers<[1], [0], [0], [1], [0, 0, 1, 1], [], []>} : vector<16x128xbf16>, vector<128x128xbf16>, vector<16x128xf32> -> vector<16x128xf32>
    %16 = arith.addf %11, %15 : vector<16x128xf32>
    %c2 = arith.constant 2 : index
    %c0_22 = arith.constant 0 : index
    %17 = vector.load %arg7[%c2, %c0_22] : memref<18x128xbf16, #tpu.memory_space<vmem>>, vector<16x128xbf16>
    %c2_23 = arith.constant 2 : index
    %c0_24 = arith.constant 0 : index
    %c0_25 = arith.constant 0 : index
    %18 = vector.load %arg2[%c2_23, %c0_24, %c0_25] : memref<3x128x128xbf16, #tpu.memory_space<vmem>>, vector<1x128x128xbf16>
    %19 = vector.shape_cast %18 : vector<1x128x128xbf16> to vector<128x128xbf16>
    %cst_26 = arith.constant dense<0.000000e+00> : vector<16x128xf32>
    %20 = tpu.matmul %17, %19, %cst_26 {dimension_numbers = #tpu.dot_dimension_numbers<[1], [0], [0], [1], [0, 0, 1, 1], [], []>} : vector<16x128xbf16>, vector<128x128xbf16>, vector<16x128xf32> -> vector<16x128xf32>
    %21 = arith.addf %16, %20 : vector<16x128xf32>
    %c0_27 = arith.constant 0 : index
    %c0_28 = arith.constant 0 : index
    %22 = vector.load %arg3[%c0_27, %c0_28] : memref<1x128xf32, #tpu.memory_space<vmem>>, vector<1x128xf32>
    %23 = vector.broadcast %22 : vector<1x128xf32> to vector<16x128xf32>
    %24 = arith.addf %21, %23 : vector<16x128xf32>
    %cst_29 = arith.constant 0.000000e+00 : f32
    %25 = vector.broadcast %cst_29 : f32 to vector<16x128xf32>
    %26 = arith.maximumf %24, %25 : vector<16x128xf32>
    %27 = arith.truncf %26 : vector<16x128xf32> to vector<16x128xbf16>
    %c1_30 = arith.constant 1 : index
    %c0_31 = arith.constant 0 : index
    %28 = vector.load %arg8[%c1_30, %c0_31] : memref<18x128xbf16, #tpu.memory_space<vmem>>, vector<16x128xbf16>
    tpu.vector_store %arg8[%c1_30, %c0_31], %27 {strides = array<i32>} : memref<18x128xbf16, #tpu.memory_space<vmem>>, vector<16x128xbf16>,
    %c0_32 = arith.constant 0 : index
    %c0_33 = arith.constant 0 : index
    %29 = vector.load %arg8[%c0_32, %c0_33] : memref<18x128xbf16, #tpu.memory_space<vmem>>, vector<16x128xbf16>
    %c0_34 = arith.constant 0 : index
    %c0_35 = arith.constant 0 : index
    %c0_36 = arith.constant 0 : index
    %30 = vector.load %arg4[%c0_34, %c0_35, %c0_36] : memref<3x128x128xbf16, #tpu.memory_space<vmem>>, vector<1x128x128xbf16>
    %31 = vector.shape_cast %30 : vector<1x128x128xbf16> to vector<128x128xbf16>
    %cst_37 = arith.constant dense<0.000000e+00> : vector<16x128xf32>
    %32 = tpu.matmul %29, %31, %cst_37 {dimension_numbers = #tpu.dot_dimension_numbers<[1], [0], [0], [1], [0, 0, 1, 1], [], []>} : vector<16x128xbf16>, vector<128x128xbf16>, vector<16x128xf32> -> vector<16x128xf32>
    %c1_38 = arith.constant 1 : index
    %c0_39 = arith.constant 0 : index
    %33 = vector.load %arg8[%c1_38, %c0_39] : memref<18x128xbf16, #tpu.memory_space<vmem>>, vector<16x128xbf16>
    %c1_40 = arith.constant 1 : index
    %c0_41 = arith.constant 0 : index
    %c0_42 = arith.constant 0 : index
    %34 = vector.load %arg4[%c1_40, %c0_41, %c0_42] : memref<3x128x128xbf16, #tpu.memory_space<vmem>>, vector<1x128x128xbf16>
    %35 = vector.shape_cast %34 : vector<1x128x128xbf16> to vector<128x128xbf16>
    %cst_43 = arith.constant dense<0.000000e+00> : vector<16x128xf32>
    %36 = tpu.matmul %33, %35, %cst_43 {dimension_numbers = #tpu.dot_dimension_numbers<[1], [0], [0], [1], [0, 0, 1, 1], [], []>} : vector<16x128xbf16>, vector<128x128xbf16>, vector<16x128xf32> -> vector<16x128xf32>
    %37 = arith.addf %32, %36 : vector<16x128xf32>
    %c2_44 = arith.constant 2 : index
    %c0_45 = arith.constant 0 : index
    %38 = vector.load %arg8[%c2_44, %c0_45] : memref<18x128xbf16, #tpu.memory_space<vmem>>, vector<16x128xbf16>
    %c2_46 = arith.constant 2 : index
    %c0_47 = arith.constant 0 : index
    %c0_48 = arith.constant 0 : index
    %39 = vector.load %arg4[%c2_46, %c0_47, %c0_48] : memref<3x128x128xbf16, #tpu.memory_space<vmem>>, vector<1x128x128xbf16>
    %40 = vector.shape_cast %39 : vector<1x128x128xbf16> to vector<128x128xbf16>
    %cst_49 = arith.constant dense<0.000000e+00> : vector<16x128xf32>
    %41 = tpu.matmul %38, %40, %cst_49 {dimension_numbers = #tpu.dot_dimension_numbers<[1], [0], [0], [1], [0, 0, 1, 1], [], []>} : vector<16x128xbf16>, vector<128x128xbf16>, vector<16x128xf32> -> vector<16x128xf32>
    %42 = arith.addf %37, %41 : vector<16x128xf32>
    %c0_50 = arith.constant 0 : index
    %c0_51 = arith.constant 0 : index
    %43 = vector.load %arg5[%c0_50, %c0_51] : memref<1x128xf32, #tpu.memory_space<vmem>>, vector<1x128xf32>
    %44 = vector.broadcast %43 : vector<1x128xf32> to vector<16x128xf32>
    %45 = arith.addf %42, %44 : vector<16x128xf32>
    %46 = arith.extf %6 : vector<16x128xbf16> to vector<16x128xf32>
    %47 = arith.addf %45, %46 : vector<16x128xf32>
    %cst_52 = arith.constant 0.000000e+00 : f32
    %48 = vector.broadcast %cst_52 : f32 to vector<16x128xf32>
    %49 = arith.maximumf %47, %48 : vector<16x128xf32>
    %c0_53 = arith.constant 0 : index
    %c0_54 = arith.constant 0 : index
    %c0_55 = arith.constant 0 : index
    %50 = vector.load %arg6[%c0_53, %c0_54, %c0_55] : memref<1x16x128xf32, #tpu.memory_space<vmem>>, vector<1x16x128xf32>
    %51 = vector.shape_cast %50 : vector<1x16x128xf32> to vector<16x128xf32>
    %52 = vector.shape_cast %49 : vector<16x128xf32> to vector<1x16x128xf32>
    tpu.vector_store %arg6[%c0_53, %c0_54, %c0_55], %52 {strides = array<i32>} : memref<1x16x128xf32, #tpu.memory_space<vmem>>, vector<1x16x128xf32>,
    return
  }
  func.func @transform_0(%arg0: i32) -> (i32, i32, i32) {
    %c0_i32 = arith.constant 0 : i32
    %c0_i32_0 = arith.constant 0 : i32
    %c0_i32_1 = arith.constant 0 : i32
    return %arg0, %c0_i32, %c0_i32_0 : i32, i32, i32
  }
  func.func @transform_1(%arg0: i32) -> (i32, i32, i32) {
    %c0_i32 = arith.constant 0 : i32
    %c0_i32_0 = arith.constant 0 : i32
    %c0_i32_1 = arith.constant 0 : i32
    %c0_i32_2 = arith.constant 0 : i32
    return %c0_i32, %c0_i32_0, %c0_i32_1 : i32, i32, i32
  }
  func.func @transform_2(%arg0: i32) -> (i32, i32) {
    %c0_i32 = arith.constant 0 : i32
    %c0_i32_0 = arith.constant 0 : i32
    %c0_i32_1 = arith.constant 0 : i32
    return %c0_i32, %c0_i32_0 : i32, i32
  }
  func.func @transform_3(%arg0: i32) -> (i32, i32, i32) {
    %c0_i32 = arith.constant 0 : i32
    %c0_i32_0 = arith.constant 0 : i32
    %c0_i32_1 = arith.constant 0 : i32
    %c0_i32_2 = arith.constant 0 : i32
    return %c0_i32, %c0_i32_0, %c0_i32_1 : i32, i32, i32
  }
  func.func @transform_4(%arg0: i32) -> (i32, i32) {
    %c0_i32 = arith.constant 0 : i32
    %c0_i32_0 = arith.constant 0 : i32
    %c0_i32_1 = arith.constant 0 : i32
    return %c0_i32, %c0_i32_0 : i32, i32
  }
  func.func @transform_5(%arg0: i32) -> (i32, i32, i32) {
    %c0_i32 = arith.constant 0 : i32
    %c0_i32_0 = arith.constant 0 : i32
    %c0_i32_1 = arith.constant 0 : i32
    return %arg0, %c0_i32, %c0_i32_0 : i32, i32, i32
  }
}

</mosaic_0001>

<llo_original>
// kernel: tpu_custom_call.1
$region0: #{tpu_custom_call.1}
  #allocation0 [shape = 'u32[]', space=smem, size = 0x4, offset = 0x4, fixed_abs, tag = 'smem constant byte address 0x4 - core index']
  #allocation1 [shape = 'u32[144,128]{1,0:T(1,128)}', space=vmem, size = 0x12000, scoped, tag = 'internal scratch']
  #allocation2 [shape = 'bf16[18,128]{1,0:T(8,128)(2,1)}', space=vmem, size = 0x1800, scoped, tag = 'scratch operand']
  #allocation3 [shape = 'bf16[18,128]{1,0:T(8,128)(2,1)}', space=vmem, size = 0x1800, scoped, tag = 'scratch operand']
  %s0 = inlined_call_operand.hbm [shape: bf16[2,16,128], index: 0, kind: input, shape index: {}]
  %s1 = inlined_call_operand.hbm [shape: bf16[3,128,128], index: 1, kind: input, shape index: {}]
  %s2 = inlined_call_operand.vmem [shape: f32[1,128], index: 2, kind: input, shape index: {}]
  %s3 = inlined_call_operand.hbm [shape: bf16[3,128,128], index: 3, kind: input, shape index: {}]
  %s4 = inlined_call_operand.vmem [shape: f32[1,128], index: 4, kind: input, shape index: {}]
  %s5 = inlined_call_operand.hbm [shape: f32[2,16,128], index: 5, kind: output, shape index: {}]
  %s6 = sld [smem:[#allocation0]]
  $region65: #{tpu_custom_call.1} parent=0
    _
  %s8 = ssub.s32 1, %s6
  %s9 = scalar_select 0, %s8, %s6
  $region1: #{tpu_custom_call.1} parent=0
    #allocation4 [shape = 'u8[8192]{0}', space=vmem, size = 0x2000, scoped, tag = 'input window, operand 0']
    #allocation5 [shape = 's32[2]{0}', space=sflag, size = 0x8, scoped, tag = 'scoped memory for tpu_custom_call.1']
    #allocation6 [shape = 's32[2]{0}', space=sflag, size = 0x8, scoped, tag = 'scoped memory for tpu_custom_call.1']
    #allocation7 [shape = 'u8[98304]{0}', space=vmem, size = 0x18000, scoped, tag = 'input window, operand 1, single buffered']
    #allocation8 [shape = 's32[1]{0}', space=sflag, size = 0x4, scoped, tag = 'scoped memory for tpu_custom_call.1']
    #allocation9 [shape = 'u8[98304]{0}', space=vmem, size = 0x18000, scoped, tag = 'input window, operand 3, single buffered']
    #allocation10 [shape = 'u8[16384]{0}', space=vmem, size = 0x4000, scoped, tag = 'output window, operand 0']
    %10 = vsyncpa [#allocation5], 0
    %s11 = scalar_lea.sflag [#allocation5], 1
    %12 = vsyncpa %s11, 0
    %13 = vsyncpa [#allocation8], 0
    %14 = vsyncpa [#allocation6], 0
    %s15 = scalar_lea.sflag [#allocation6], 1
    %16 = vsyncpa %s15, 0
    loop: start=0, step=1, limit=4
    $region2: #{tpu_custom_call.1} parent=1 // loop_pre_header
      _
    $region3: #{tpu_custom_call.1} parent=1 // loop_header
      %s18 = sphi 0, %s22
      %p19 = scmp.ge.s32.totalorder %s18, 4
      %s28 = sphi 0, %s30
      %s31 = sphi 0, %s28
      %s32 = sphi 0, %s31
      %s48 = sphi 0, %s32
      %s52 = sphi 0, %s52
      %s54 = sphi 0, %s52
      %s55 = sphi 0, %s54
      %s69 = sphi 0, %s55
      %s73 = sphi 0, %s73
      %s75 = sphi 0, %s73
      %s76 = sphi 0, %s75
      %s90 = sphi 0, %s76
      %s94 = sphi 0, %s94
      %s96 = sphi 0, %s94
      %s97 = sphi 0, %s96
      %s111 = sphi 0, %s97
      %s115 = sphi 0, %s115
      %s117 = sphi 0, %s115
      %s118 = sphi 0, %s117
      %s132 = sphi 0, %s118
      %s138 = sphi 0, %s140
      %s141 = sphi 0, %s138
      %s142 = sphi 0, %s141
      %s158 = sphi 0, %s142
    $region4: #{tpu_custom_call.1} parent=1 // loop_header_branch
      %21 = sbr.rel (%p19) target = $region8
    $region5: #{tpu_custom_call.1} parent=1 // loop_body
      %s23 = ssub.s32 %s18, 1
      %s24 = ssub.s32 %s18, 2
      %s25 = sadd.s32 %s18, 1
      %s26 = ssub.s32 %s18, %s25
      %p27 = scmp.eq.s32.totalorder %s26, 0
      %s29 = sadd.s32 %s28, 1
      %s30 = scalar_select %p27, %s28, %s29
      %p33 = pneg %p27
      %p34 = scmp.eq.s32.totalorder %s18, 1
      %p35 = por %p33, %p34
      %p36 = scmp.ne.s32.totalorder %s28, %s31
      %p37 = scmp.eq.s32.totalorder %s18, 0
      %p38 = por %p36, %p37
      %p39 = scmp.ne.s32.totalorder %s28, %s31
      %p40 = scmp.eq.s32.totalorder %s23, 1
      %p41 = por %p39, %p40
      %p42 = scmp.ne.s32.totalorder %s31, %s32
      %p43 = scmp.eq.s32.totalorder %s23, 0
      %p44 = por %p42, %p43
      %p45 = scmp.ne.s32.totalorder %s31, %s32
      %p46 = scmp.eq.s32.totalorder %s24, 1
      %p47 = por %p45, %p46
      %p49 = scmp.ne.s32.totalorder %s32, %s48
      %p50 = scmp.eq.s32.totalorder %s24, 0
      %p51 = por %p49, %p50
      %s53 = sadd.s32 %s52, 1
      %p56 = scmp.eq.s32.totalorder %s18, 1
      %p57 = scmp.ne.s32.totalorder %s52, %s54
      %p58 = scmp.eq.s32.totalorder %s18, 0
      %p59 = por %p57, %p58
      %p60 = scmp.ne.s32.totalorder %s52, %s54
      %p61 = scmp.eq.s32.totalorder %s23, 1
      %p62 = por %p60, %p61
      %p63 = scmp.ne.s32.totalorder %s54, %s55
      %p64 = scmp.eq.s32.totalorder %s23, 0
      %p65 = por %p63, %p64
      %p66 = scmp.ne.s32.totalorder %s54, %s55
      %p67 = scmp.eq.s32.totalorder %s24, 1
      %p68 = por %p66, %p67
      %p70 = scmp.ne.s32.totalorder %s55, %s69
      %p71 = scmp.eq.s32.totalorder %s24, 0
      %p72 = por %p70, %p71
      %s74 = sadd.s32 %s73, 1
      %p77 = scmp.eq.s32.totalorder %s18, 1
      %p78 = scmp.ne.s32.totalorder %s73, %s75
      %p79 = scmp.eq.s32.totalorder %s18, 0
      %p80 = por %p78, %p79
      %p81 = scmp.ne.s32.totalorder %s73, %s75
      %p82 = scmp.eq.s32.totalorder %s23, 1
      %p83 = por %p81, %p82
      %p84 = scmp.ne.s32.totalorder %s75, %s76
      %p85 = scmp.eq.s32.totalorder %s23, 0
      %p86 = por %p84, %p85
      %p87 = scmp.ne.s32.totalorder %s75, %s76
      %p88 = scmp.eq.s32.totalorder %s24, 1
      %p89 = por %p87, %p88
      %p91 = scmp.ne.s32.totalorder %s76, %s90
      %p92 = scmp.eq.s32.totalorder %s24, 0
      %p93 = por %p91, %p92
      %s95 = sadd.s32 %s94, 1
      %p98 = scmp.eq.s32.totalorder %s18, 1
      %p99 = scmp.ne.s32.totalorder %s94, %s96
      %p100 = scmp.eq.s32.totalorder %s18, 0
      %p101 = por %p99, %p100
      %p102 = scmp.ne.s32.totalorder %s94, %s96
      %p103 = scmp.eq.s32.totalorder %s23, 1
      %p104 = por %p102, %p103
      %p105 = scmp.ne.s32.totalorder %s96, %s97
      %p106 = scmp.eq.s32.totalorder %s23, 0
      %p107 = por %p105, %p106
      %p108 = scmp.ne.s32.totalorder %s96, %s97
      %p109 = scmp.eq.s32.totalorder %s24, 1
      %p110 = por %p108, %p109
      %p112 = scmp.ne.s32.totalorder %s97, %s111
      %p113 = scmp.eq.s32.totalorder %s24, 0
      %p114 = por %p112, %p113
      %s116 = sadd.s32 %s115, 1
      %p119 = scmp.eq.s32.totalorder %s18, 1
      %p120 = scmp.ne.s32.totalorder %s115, %s117
      %p121 = scmp.eq.s32.totalorder %s18, 0
      %p122 = por %p120, %p121
      %p123 = scmp.ne.s32.totalorder %s115, %s117
      %p124 = scmp.eq.s32.totalorder %s23, 1
      %p125 = por %p123, %p124
      %p126 = scmp.ne.s32.totalorder %s117, %s118
      %p127 = scmp.eq.s32.totalorder %s23, 0
      %p128 = por %p126, %p127
      %p129 = scmp.ne.s32.totalorder %s117, %s118
      %p130 = scmp.eq.s32.totalorder %s24, 1
      %p131 = por %p129, %p130
      %p133 = scmp.ne.s32.totalorder %s118, %s132
      %p134 = scmp.eq.s32.totalorder %s24, 0
      %p135 = por %p133, %p134
      %s136 = ssub.s32 %s18, %s25
      %p137 = scmp.eq.s32.totalorder %s136, 0
      %s139 = sadd.s32 %s138, 1
      %s140 = scalar_select %p137, %s138, %s139
      %p143 = pneg %p137
      %p144 = scmp.eq.s32.totalorder %s18, 1
      %p145 = por %p143, %p144
      %p146 = scmp.ne.s32.totalorder %s138, %s141
      %p147 = scmp.eq.s32.totalorder %s18, 0
      %p148 = por %p146, %p147
      %p149 = scmp.ne.s32.totalorder %s138, %s141
      %p150 = scmp.eq.s32.totalorder %s23, 1
      %p151 = por %p149, %p150
      %p152 = scmp.ne.s32.totalorder %s141, %s142
      %p153 = scmp.eq.s32.totalorder %s23, 0
      %p154 = por %p152, %p153
      %p155 = scmp.ne.s32.totalorder %s141, %s142
      %p156 = scmp.eq.s32.totalorder %s24, 1
      %p157 = por %p155, %p156
      %p159 = scmp.ne.s32.totalorder %s142, %s158
      %p160 = scmp.eq.s32.totalorder %s24, 0
      %p161 = por %p159, %p160
      %p162 = scmp.le.s32.totalorder 1, %s18
      %p163 = scmp.lt.s32.totalorder %s18, 3
      %p164 = pnand %p162, %p163
      %p165 = pneg %p164
      // Predicated region
      $region9: #{tpu_custom_call.1} parent=5 // pred_check
        _
      $region10: #{tpu_custom_call.1} parent=5 // pred_check_branch
        %167 = sbr.rel (%p164) target = $region12
      $region11: #{tpu_custom_call.1} parent=5 // pred_region
        %s168 = ssub.s32 %s18, 1
        // Predicated region
        $region13: #{tpu_custom_call.1} parent=11 // pred_check
          %p169 = pneg %p65
        $region14: #{tpu_custom_call.1} parent=11 // pred_check_branch
          %171 = sbr.rel (%p169) target = $region16
        $region15: #{tpu_custom_call.1} parent=11 // pred_region
          %s173 = ssub.s32 3072, 3072
          %174 = vsyncadd [#allocation8], %s173
          %s175 = sshll.u32 [#allocation7], 4
          %s176 = int_to_ptr.vmem [resolvable:$true] %s175
          %181 = dma.hbm_to_vmem [thread:$0]  %s1, 3072, %s176, [#allocation8], 64, 64, 4
        $region16: #{tpu_custom_call.1} parent=11 // pred_fallthru
          _
        // Predicated region
        $region17: #{tpu_custom_call.1} parent=11 // pred_check
          %p182 = pneg %p86
        $region18: #{tpu_custom_call.1} parent=11 // pred_check_branch
          %184 = sbr.rel (%p182) target = $region20
        $region19: #{tpu_custom_call.1} parent=11 // pred_region
          _
        $region20: #{tpu_custom_call.1} parent=11 // pred_fallthru
          _
        // Predicated region
        $region21: #{tpu_custom_call.1} parent=11 // pred_check
          %p185 = pneg %p107
        $region22: #{tpu_custom_call.1} parent=11 // pred_check_branch
          %187 = sbr.rel (%p185) target = $region24
        $region23: #{tpu_custom_call.1} parent=11 // pred_region
          %s189 = ssub.s32 3072, 3072
          %190 = vsyncadd [#allocation8], %s189
          %s191 = sshll.u32 [#allocation9], 4
          %s192 = int_to_ptr.vmem [resolvable:$true] %s191
          %197 = dma.hbm_to_vmem [thread:$0]  %s3, 3072, %s192, [#allocation8], 64, 64, 4
        $region24: #{tpu_custom_call.1} parent=11 // pred_fallthru
          _
        // Predicated region
        $region25: #{tpu_custom_call.1} parent=11 // pred_check
          %p198 = pneg %p128
        $region26: #{tpu_custom_call.1} parent=11 // pred_check_branch
          %200 = sbr.rel (%p198) target = $region28
        $region27: #{tpu_custom_call.1} parent=11 // pred_region
          _
        $region28: #{tpu_custom_call.1} parent=11 // pred_fallthru
          _
      $region12: #{tpu_custom_call.1} parent=5 // pred_fallthru
        _
      %p201 = scmp.lt.s32.totalorder %s18, 2
      // Predicated region
      $region29: #{tpu_custom_call.1} parent=5 // pred_check
        %p202 = pneg %p201
      $region30: #{tpu_custom_call.1} parent=5 // pred_check_branch
        %204 = sbr.rel (%p202) target = $region32
      $region31: #{tpu_custom_call.1} parent=5 // pred_region
        // Predicated region
        $region33: #{tpu_custom_call.1} parent=31 // pred_check
          %p205 = pneg %p38
        $region34: #{tpu_custom_call.1} parent=31 // pred_check_branch
          %207 = sbr.rel (%p205) target = $region36
        $region35: #{tpu_custom_call.1} parent=31 // pred_region
          %s208 = sand.u32 %s28, 1
          %s209 = scalar_lea.sflag [#allocation5], %s208
          %s210 = sand.u32 %s28, 1
          %s211 = smul.addr %s210, 8
          %s212 = scalar_lea.vmem [#allocation4], %s211
          %s214 = ssub.s32 128, 128
          %215 = vsyncadd %s209, %s214
          %s216 = smul.addr %s18, 2
          %s217 = smul.addr %s216, 64
          %s218 = scalar_lea.hbm %s0, %s217
          %s219 = sshll.u32 %s212, 4
          %s220 = int_to_ptr.vmem [resolvable:$true] %s219
          %225 = dma.hbm_to_vmem [thread:$0]  %s218, 128, %s220, %s209, 64, 64, 4
        $region36: #{tpu_custom_call.1} parent=31 // pred_fallthru
          _
      $region32: #{tpu_custom_call.1} parent=5 // pred_fallthru
        _
      %p226 = scmp.le.s32.totalorder 1, %s18
      %p227 = scmp.lt.s32.totalorder %s18, 3
      %p228 = pnand %p226, %p227
      %p229 = pneg %p228
      // Predicated region
      $region37: #{tpu_custom_call.1} parent=5 // pred_check
        _
      $region38: #{tpu_custom_call.1} parent=5 // pred_check_branch
        %231 = sbr.rel (%p228) target = $region40
      $region39: #{tpu_custom_call.1} parent=5 // pred_region
        %s232 = ssub.s32 %s18, 1
        %s233 = sand.u32 %s31, 1
        %s234 = scalar_lea.sflag [#allocation5], %s233
        %s235 = sand.u32 %s31, 1
        %s236 = smul.addr %s235, 8
        %s237 = scalar_lea.vmem [#allocation4], %s236
        // Predicated region
        $region41: #{tpu_custom_call.1} parent=39 // pred_check
          %p238 = pneg %p44
        $region42: #{tpu_custom_call.1} parent=39 // pred_check_branch
          %240 = sbr.rel (%p238) target = $region44
        $region43: #{tpu_custom_call.1} parent=39 // pred_region
          %241 = dma.done %s234, 128
        $region44: #{tpu_custom_call.1} parent=39 // pred_fallthru
          _
        // Predicated region
        $region45: #{tpu_custom_call.1} parent=39 // pred_check
          %p242 = pneg %p65
        $region46: #{tpu_custom_call.1} parent=39 // pred_check_branch
          %244 = sbr.rel (%p242) target = $region48
        $region47: #{tpu_custom_call.1} parent=39 // pred_region
          %245 = dma.done [#allocation8], 3072
        $region48: #{tpu_custom_call.1} parent=39 // pred_fallthru
          _
        // Predicated region
        $region49: #{tpu_custom_call.1} parent=39 // pred_check
          %p246 = pneg %p107
        $region50: #{tpu_custom_call.1} parent=39 // pred_check_branch
          %248 = sbr.rel (%p246) target = $region52
        $region51: #{tpu_custom_call.1} parent=39 // pred_region
          %249 = dma.done [#allocation8], 3072
        $region52: #{tpu_custom_call.1} parent=39 // pred_fallthru
          _
        %s250 = sand.u32 %s31, 1
        %s251 = scalar_lea.sflag [#allocation5], %s250
        %s252 = sand.u32 %s31, 1
        %s253 = smul.addr %s252, 8
        %s254 = scalar_lea.vmem [#allocation4], %s253
        %p255 = pneg %p44
        %p256 = pneg %p41
        %p257 = pneg %p65
        %p258 = pneg %p62
        %p259 = pneg %p86
        %p260 = pneg %p83
        %p261 = pneg %p107
        %p262 = pneg %p104
        %p263 = pneg %p128
        %p264 = pneg %p125
        %p265 = pneg %p154
        %p266 = pneg %p151
        %s267 = sand.u32 %s141, 1
        %s268 = scalar_lea.sflag [#allocation6], %s267
        %s269 = sand.u32 %s141, 1
        %s270 = smul.addr %s269, 16
        %s271 = scalar_lea.vmem [#allocation10], %s270
        %vm273 = vcmask 1040384
        %vm274 = vsmask.f32 256
        %vm275 = vmand %vm273, %vm274
        %v276 = vld [vmem:[#allocation2] sm:$0x1]
        %v277 = vsel %vm275, 0, %v276
        %278 = vst [vmem:[#allocation2] sm:$0x1] %v277
        %vm279 = vsmask.f32 7938
        %vm280 = vmand %vm273, %vm279
        %v281 = vld [vmem:[#allocation2 + $0x8] sm:$0x1]
        %v282 = vsel %vm280, 0, %v281
        %283 = vst [vmem:[#allocation2 + $0x8] sm:$0x1] %v282
        %v284 = vld [vmem:[#allocation3] sm:$0x1]
        %v285 = vsel %vm275, 0, %v284
        %286 = vst [vmem:[#allocation3] sm:$0x1] %v285
        %v287 = vld [vmem:[#allocation3 + $0x8] sm:$0x1]
        %v288 = vsel %vm280, 0, %v287
        %289 = vst [vmem:[#allocation3 + $0x8] sm:$0x1] %v288
        %v290 = vld [vmem:[%s237] sm:$0xf]
        %v291 = vld [vmem:[%s237 + $0x4] sm:$0xf]
        %vm292 = vsmask.f32 4368
        %vm293 = vmor %vm274, %vm292
        %v295 = vshrl.u32 %v290, 16
        %v297 = vrot.slane %v295, 7
        %v298 = vshll.u32 %v290, 16
        %v300 = vor.u32 %v297, %v298
        %v301 = vrot.slane %v297, 4
        %v303 = vshrl.u32 %v291, 16
        %v305 = vrot.slane %v303, 7
        %v306 = vshll.u32 %v291, 16
        %v308 = vor.u32 %v305, %v306
        %v309 = vsel %vm293, %v301, %v308
        %v310 = vrot.slane %v305, 4
        %vm314 = vcmask 1043456
        %vm315 = vmand %vm314, %vm279
        %v316 = vld [vmem:[#allocation2] sm:$0xf]
        %v317 = vsel %vm315, %v300, %v316
        %318 = vst [vmem:[#allocation2] sm:$0xf] %v317
        %319 = vst [vmem:[#allocation2 + $0x4] sm:$0xf] %v309
        %v320 = vld [vmem:[#allocation2 + $0x8] sm:$0x1]
        %v321 = vsel %vm275, %v310, %v320
        %322 = vst [vmem:[#allocation2 + $0x8] sm:$0x1] %v321
        %v323 = vld [vmem:[#allocation2] sm:$0xf]
        %v324 = vld [vmem:[#allocation2 + $0x4] sm:$0xf]
        %v325 = vld [vmem:[#allocation7] sm:$0xf]
        %v326 = vld [vmem:[#allocation7 + $0x4] sm:$0xf]
        %v327 = vld [vmem:[#allocation7 + $0x8] sm:$0xf]
        %v328 = vld [vmem:[#allocation7 + $0xc] sm:$0xf]
        %v329 = vld [vmem:[#allocation7 + $0x10] sm:$0xf]
        %v330 = vld [vmem:[#allocation7 + $0x14] sm:$0xf]
        %v331 = vld [vmem:[#allocation7 + $0x18] sm:$0xf]
        %v332 = vld [vmem:[#allocation7 + $0x1c] sm:$0xf]
        %v333 = vld [vmem:[#allocation7 + $0x20] sm:$0xf]
        %v334 = vld [vmem:[#allocation7 + $0x24] sm:$0xf]
        %v335 = vld [vmem:[#allocation7 + $0x28] sm:$0xf]
        %v336 = vld [vmem:[#allocation7 + $0x2c] sm:$0xf]
        %v337 = vld [vmem:[#allocation7 + $0x30] sm:$0xf]
        %v338 = vld [vmem:[#allocation7 + $0x34] sm:$0xf]
        %v339 = vld [vmem:[#allocation7 + $0x38] sm:$0xf]
        %v340 = vld [vmem:[#allocation7 + $0x3c] sm:$0xf]
        %v341 = vld [vmem:[#allocation2 + $0x8] sm:$0x1]
        %s342 = scalar_lea.vmem [#allocation7], 64
        %v343 = vld [vmem:[%s342] sm:$0xf]
        %v344 = vld [vmem:[%s342 + $0x4] sm:$0xf]
        %v345 = vld [vmem:[%s342 + $0x8] sm:$0xf]
        %v346 = vld [vmem:[%s342 + $0xc] sm:$0xf]
        %v347 = vld [vmem:[%s342 + $0x10] sm:$0xf]
        %v348 = vld [vmem:[%s342 + $0x14] sm:$0xf]
        %v349 = vld [vmem:[%s342 + $0x18] sm:$0xf]
        %v350 = vld [vmem:[%s342 + $0x1c] sm:$0xf]
        %v351 = vld [vmem:[%s342 + $0x20] sm:$0xf]
        %v352 = vld [vmem:[%s342 + $0x24] sm:$0xf]
        %v353 = vld [vmem:[%s342 + $0x28] sm:$0xf]
        %v354 = vld [vmem:[%s342 + $0x2c] sm:$0xf]
        %v355 = vld [vmem:[%s342 + $0x30] sm:$0xf]
        %v356 = vld [vmem:[%s342 + $0x34] sm:$0xf]
        %v357 = vld [vmem:[%s342 + $0x38] sm:$0xf]
        %v358 = vld [vmem:[%s342 + $0x3c] sm:$0xf]
        %v362 = vunpack.c.l.b16 %v323
        %v363 = vunpack.c.l.b16 %v324
        %v364 = vunpack.c.l.b16 %v341
        %v365 = vpack.c.b16 %v363, %v362
        %v366 = vpack.c.b16 %v364, %v364
        %vm367 = vsmask.f32 7424
        %v369 = vshrl.u32 %v365, 16
        %v371 = vshll.u32 %v365, 16
        %v373 = vrot.slane %v371, 1
        %v374 = vor.u32 %v369, %v373
        %v376 = vshll.u32 %v366, 16
        %v378 = vrot.slane %v376, 1
        %v379 = vsel %vm367, %v374, %v378
        %v397 = vunpack.c.l.b16 %v343
        %v398 = vunpack.c.l.b16 %v344
        %v399 = vunpack.c.l.b16 %v345
        %v400 = vunpack.c.l.b16 %v346
        %v401 = vunpack.c.l.b16 %v347
        %v402 = vunpack.c.l.b16 %v348
        %v403 = vunpack.c.l.b16 %v349
        %v404 = vunpack.c.l.b16 %v350
        %v405 = vunpack.c.l.b16 %v351
        %v406 = vunpack.c.l.b16 %v352
        %v407 = vunpack.c.l.b16 %v353
        %v408 = vunpack.c.l.b16 %v354
        %v409 = vunpack.c.l.b16 %v355
        %v410 = vunpack.c.l.b16 %v356
        %v411 = vunpack.c.l.b16 %v357
        %v412 = vunpack.c.l.b16 %v358
        %v413 = vpack.c.b16 %v398, %v397
        %v414 = vpack.c.b16 %v400, %v399
        %v415 = vpack.c.b16 %v402, %v401
        %v416 = vpack.c.b16 %v404, %v403
        %v417 = vpack.c.b16 %v406, %v405
        %v418 = vpack.c.b16 %v408, %v407
        %v419 = vpack.c.b16 %v410, %v409
        %v420 = vpack.c.b16 %v412, %v411
        %429 = vmatprep.subr.bf16.mxu0 0
        %430 = vmatpush1.bf16.msra.mxu0 %v413
        %431 = vmatprep.subr.bf16.mxu0 0
        %432 = vmatpush1.bf16.msra.mxu0 %v414
        %433 = vmatprep.subr.bf16.mxu0 0
        %434 = vmatpush1.bf16.msra.mxu0 %v415
        %435 = vmatprep.subr.bf16.mxu0 0
        %436 = vmatpush1.bf16.msra.mxu0 %v416
        %437 = vmatprep.subr.bf16.mxu0 0
        %438 = vmatpush1.bf16.msra.mxu0 %v417
        %439 = vmatprep.subr.bf16.mxu0 0
        %440 = vmatpush1.bf16.msra.mxu0 %v418
        %441 = vmatprep.subr.bf16.mxu0 0
        %442 = vmatpush1.bf16.msra.mxu0 %v419
        %443 = vmatprep.subr.bf16.mxu0 0
        %444 = vmatpush1.bf16.msra.mxu0 %v420
        %445 = vmatprep.subr.bf16.mxu0 0
        %446 = vmatpush1.bf16.msra.mxu0 0
        %447 = vmatprep.subr.bf16.mxu0 0
        %448 = vmatpush1.bf16.msra.mxu0 0
        %449 = vmatprep.subr.bf16.mxu0 0
        %450 = vmatpush1.bf16.msra.mxu0 0
        %451 = vmatprep.subr.bf16.mxu0 0
        %452 = vmatpush1.bf16.msra.mxu0 0
        %453 = vmatprep.subr.bf16.mxu0 0
        %454 = vmatpush1.bf16.msra.mxu0 0
        %455 = vmatprep.subr.bf16.mxu0 0
        %456 = vmatpush1.bf16.msra.mxu0 0
        %457 = vmatprep.subr.bf16.mxu0 0
        %458 = vmatpush1.bf16.msra.mxu0 0
        %459 = vmatprep.subr.bf16.mxu0 0
        %460 = vmatpush1.bf16.msra.mxu0 0
        %461 = vmatprep.mubr.bf16.mxu0 0
        %462 = vmatmul.mubr.bf16.gmra.mrb[0].mxu0 %v379
        %v463 = vpop.f32.mrb[0].mxu0
        %v464 = vadd.f32 0.0, %v463
        %v465 = vpop.f32.mrb[0].mxu0
        %v466 = vpop.f32.mrb[0].mxu0
        %v467 = vadd.f32 0.0, %v466
        %v468 = vpop.f32.mrb[0].mxu0
        %469 = vdwg.mxu0
        %v487 = vunpack.c.l.b16 %v325
        %v488 = vunpack.c.l.b16 %v326
        %v489 = vunpack.c.l.b16 %v327
        %v490 = vunpack.c.l.b16 %v328
        %v491 = vunpack.c.l.b16 %v329
        %v492 = vunpack.c.l.b16 %v330
        %v493 = vunpack.c.l.b16 %v331
        %v494 = vunpack.c.l.b16 %v332
        %v495 = vunpack.c.l.b16 %v333
        %v496 = vunpack.c.l.b16 %v334
        %v497 = vunpack.c.l.b16 %v335
        %v498 = vunpack.c.l.b16 %v336
        %v499 = vunpack.c.l.b16 %v337
        %v500 = vunpack.c.l.b16 %v338
        %v501 = vunpack.c.l.b16 %v339
        %v502 = vunpack.c.l.b16 %v340
        %v503 = vpack.c.b16 %v488, %v487
        %v504 = vpack.c.b16 %v490, %v489
        %v505 = vpack.c.b16 %v492, %v491
        %v506 = vpack.c.b16 %v494, %v493
        %v507 = vpack.c.b16 %v496, %v495
        %v508 = vpack.c.b16 %v498, %v497
        %v509 = vpack.c.b16 %v500, %v499
        %v510 = vpack.c.b16 %v502, %v501
        %519 = vmatprep.subr.bf16.mxu0 0
        %520 = vmatpush1.bf16.msra.mxu0 %v503
        %521 = vmatprep.subr.bf16.mxu0 0
        %522 = vmatpush1.bf16.msra.mxu0 %v504
        %523 = vmatprep.subr.bf16.mxu0 0
        %524 = vmatpush1.bf16.msra.mxu0 %v505
        %525 = vmatprep.subr.bf16.mxu0 0
        %526 = vmatpush1.bf16.msra.mxu0 %v506
        %527 = vmatprep.subr.bf16.mxu0 0
        %528 = vmatpush1.bf16.msra.mxu0 %v507
        %529 = vmatprep.subr.bf16.mxu0 0
        %530 = vmatpush1.bf16.msra.mxu0 %v508
        %531 = vmatprep.subr.bf16.mxu0 0
        %532 = vmatpush1.bf16.msra.mxu0 %v509
        %533 = vmatprep.subr.bf16.mxu0 0
        %534 = vmatpush1.bf16.msra.mxu0 %v510
        %535 = vmatprep.subr.bf16.mxu0 0
        %536 = vmatpush1.bf16.msra.mxu0 0
        %537 = vmatprep.subr.bf16.mxu0 0
        %538 = vmatpush1.bf16.msra.mxu0 0
        %539 = vmatprep.subr.bf16.mxu0 0
        %540 = vmatpush1.bf16.msra.mxu0 0
        %541 = vmatprep.subr.bf16.mxu0 0
        %542 = vmatpush1.bf16.msra.mxu0 0
        %543 = vmatprep.subr.bf16.mxu0 0
        %544 = vmatpush1.bf16.msra.mxu0 0
        %545 = vmatprep.subr.bf16.mxu0 0
        %546 = vmatpush1.bf16.msra.mxu0 0
        %547 = vmatprep.subr.bf16.mxu0 0
        %548 = vmatpush1.bf16.msra.mxu0 0
        %549 = vmatprep.subr.bf16.mxu0 0
        %550 = vmatpush1.bf16.msra.mxu0 0
        %551 = vmatprep.mubr.bf16.mxu0 0
        %552 = vmatmul.mubr.bf16.gmra.mrb[0].mxu0 %v365
        %v553 = vpop.f32.mrb[0].mxu0
        %v554 = vadd.f32 %v464, %v553
        %v555 = vpop.f32.mrb[0].mxu0
        %v556 = vpop.f32.mrb[0].mxu0
        %v557 = vadd.f32 %v467, %v556
        %v558 = vpop.f32.mrb[0].mxu0
        %559 = vdwg.mxu0
        %v560 = vld [vmem:[#allocation2] sm:$0xe]
        %s561 = scalar_lea.vmem [#allocation7], 128
        %v562 = vld [vmem:[%s561] sm:$0xf]
        %v563 = vld [vmem:[%s561 + $0x4] sm:$0xf]
        %v564 = vld [vmem:[%s561 + $0x8] sm:$0xf]
        %v565 = vld [vmem:[%s561 + $0xc] sm:$0xf]
        %v566 = vld [vmem:[%s561 + $0x10] sm:$0xf]
        %v567 = vld [vmem:[%s561 + $0x14] sm:$0xf]
        %v568 = vld [vmem:[%s561 + $0x18] sm:$0xf]
        %v569 = vld [vmem:[%s561 + $0x1c] sm:$0xf]
        %v570 = vld [vmem:[%s561 + $0x20] sm:$0xf]
        %v571 = vld [vmem:[%s561 + $0x24] sm:$0xf]
        %v572 = vld [vmem:[%s561 + $0x28] sm:$0xf]
        %v573 = vld [vmem:[%s561 + $0x2c] sm:$0xf]
        %v574 = vld [vmem:[%s561 + $0x30] sm:$0xf]
        %v575 = vld [vmem:[%s561 + $0x34] sm:$0xf]
        %v576 = vld [vmem:[%s561 + $0x38] sm:$0xf]
        %v577 = vld [vmem:[%s561 + $0x3c] sm:$0xf]
        %v579 = vunpack.c.l.b16 %v560
        %v580 = vpack.c.b16 %v363, %v579
        %vm581 = vcmask 1046528
        %v582 = vrot.slane %v580, 1
        %v583 = vrot.slane %v366, 1
        %v584 = vsel %vm581, %v582, %v583
        %v602 = vunpack.c.l.b16 %v562
        %v603 = vunpack.c.l.b16 %v563
        %v604 = vunpack.c.l.b16 %v564
        %v605 = vunpack.c.l.b16 %v565
        %v606 = vunpack.c.l.b16 %v566
        %v607 = vunpack.c.l.b16 %v567
        %v608 = vunpack.c.l.b16 %v568
        %v609 = vunpack.c.l.b16 %v569
        %v610 = vunpack.c.l.b16 %v570
        %v611 = vunpack.c.l.b16 %v571
        %v612 = vunpack.c.l.b16 %v572
        %v613 = vunpack.c.l.b16 %v573
        %v614 = vunpack.c.l.b16 %v574
        %v615 = vunpack.c.l.b16 %v575
        %v616 = vunpack.c.l.b16 %v576
        %v617 = vunpack.c.l.b16 %v577
        %v618 = vpack.c.b16 %v603, %v602
        %v619 = vpack.c.b16 %v605, %v604
        %v620 = vpack.c.b16 %v607, %v606
        %v621 = vpack.c.b16 %v609, %v608
        %v622 = vpack.c.b16 %v611, %v610
        %v623 = vpack.c.b16 %v613, %v612
        %v624 = vpack.c.b16 %v615, %v614
        %v625 = vpack.c.b16 %v617, %v616
        %634 = vmatprep.subr.bf16.mxu0 0
        %635 = vmatpush1.bf16.msra.mxu0 %v618
        %636 = vmatprep.subr.bf16.mxu0 0
        %637 = vmatpush1.bf16.msra.mxu0 %v619
        %638 = vmatprep.subr.bf16.mxu0 0
        %639 = vmatpush1.bf16.msra.mxu0 %v620
        %640 = vmatprep.subr.bf16.mxu0 0
        %641 = vmatpush1.bf16.msra.mxu0 %v621
        %642 = vmatprep.subr.bf16.mxu0 0
        %643 = vmatpush1.bf16.msra.mxu0 %v622
        %644 = vmatprep.subr.bf16.mxu0 0
        %645 = vmatpush1.bf16.msra.mxu0 %v623
        %646 = vmatprep.subr.bf16.mxu0 0
        %647 = vmatpush1.bf16.msra.mxu0 %v624
        %648 = vmatprep.subr.bf16.mxu0 0
        %649 = vmatpush1.bf16.msra.mxu0 %v625
        %650 = vmatprep.subr.bf16.mxu0 0
        %651 = vmatpush1.bf16.msra.mxu0 0
        %652 = vmatprep.subr.bf16.mxu0 0
        %653 = vmatpush1.bf16.msra.mxu0 0
        %654 = vmatprep.subr.bf16.mxu0 0
        %655 = vmatpush1.bf16.msra.mxu0 0
        %656 = vmatprep.subr.bf16.mxu0 0
        %657 = vmatpush1.bf16.msra.mxu0 0
        %658 = vmatprep.subr.bf16.mxu0 0
        %659 = vmatpush1.bf16.msra.mxu0 0
        %660 = vmatprep.subr.bf16.mxu0 0
        %661 = vmatpush1.bf16.msra.mxu0 0
        %662 = vmatprep.subr.bf16.mxu0 0
        %663 = vmatpush1.bf16.msra.mxu0 0
        %664 = vmatprep.subr.bf16.mxu0 0
        %665 = vmatpush1.bf16.msra.mxu0 0
        %666 = vmatprep.mubr.bf16.mxu0 0
        %667 = vmatmul.mubr.bf16.gmra.mrb[0].mxu0 %v584
        %v668 = vpop.f32.mrb[0].mxu0
        %v669 = vadd.f32 0.0, %v668
        %v670 = vpop.f32.mrb[0].mxu0
        %v671 = vpop.f32.mrb[0].mxu0
        %v672 = vadd.f32 0.0, %v671
        %v673 = vpop.f32.mrb[0].mxu0
        %674 = vdwg.mxu0
        %v675 = vadd.f32 %v554, %v669
        %v676 = vadd.f32 %v557, %v672
        %v677 = vld [vmem:[%s2] sm:$0x1]
        %v679 = vlaneseq
        %v680 = vshrl.u32 %v679, 7
        %v681 = vsub.s32 0, %v680
        %v682 = vrot.slane %v677, %v681
        %v684 = vadd.f32 %v675, %v682
        %v685 = vadd.f32 %v676, %v682
        %v686 = vmax.f32 %v684, 0.0
        %v687 = vmax.f32 %v685, 0.0
        %v688 = vpack.c.bf16 %v687, %v686
        %v690 = vunpack.c.l.b16 %v688
        %v691 = vunpack.c.h.b16 %v688
        %v692 = vpack.c.b16 %v690, %v690
        %v693 = vpack.c.b16 %v691, %v691
        %v695 = vshrl.u32 %v692, 16
        %v697 = vrot.slane %v695, 7
        %v698 = vshll.u32 %v692, 16
        %v700 = vor.u32 %v697, %v698
        %v701 = vrot.slane %v697, 4
        %v703 = vshrl.u32 %v693, 16
        %v705 = vrot.slane %v703, 7
        %v706 = vshll.u32 %v693, 16
        %v708 = vor.u32 %v705, %v706
        %v709 = vsel %vm293, %v701, %v708
        %v710 = vrot.slane %v705, 4
        %v714 = vld [vmem:[#allocation3] sm:$0xf]
        %v715 = vsel %vm315, %v700, %v714
        %716 = vst [vmem:[#allocation3] sm:$0xf] %v715
        %717 = vst [vmem:[#allocation3 + $0x4] sm:$0xf] %v709
        %v718 = vld [vmem:[#allocation3 + $0x8] sm:$0x1]
        %v719 = vsel %vm275, %v710, %v718
        %720 = vst [vmem:[#allocation3 + $0x8] sm:$0x1] %v719
        %v721 = vld [vmem:[#allocation3] sm:$0xf]
        %v722 = vld [vmem:[#allocation3 + $0x4] sm:$0xf]
        %v723 = vld [vmem:[#allocation9] sm:$0xf]
        %v724 = vld [vmem:[#allocation9 + $0x4] sm:$0xf]
        %v725 = vld [vmem:[#allocation9 + $0x8] sm:$0xf]
        %v726 = vld [vmem:[#allocation9 + $0xc] sm:$0xf]
        %v727 = vld [vmem:[#allocation9 + $0x10] sm:$0xf]
        %v728 = vld [vmem:[#allocation9 + $0x14] sm:$0xf]
        %v729 = vld [vmem:[#allocation9 + $0x18] sm:$0xf]
        %v730 = vld [vmem:[#allocation9 + $0x1c] sm:$0xf]
        %v731 = vld [vmem:[#allocation9 + $0x20] sm:$0xf]
        %v732 = vld [vmem:[#allocation9 + $0x24] sm:$0xf]
        %v733 = vld [vmem:[#allocation9 + $0x28] sm:$0xf]
        %v734 = vld [vmem:[#allocation9 + $0x2c] sm:$0xf]
        %v735 = vld [vmem:[#allocation9 + $0x30] sm:$0xf]
        %v736 = vld [vmem:[#allocation9 + $0x34] sm:$0xf]
        %v737 = vld [vmem:[#allocation9 + $0x38] sm:$0xf]
        %v738 = vld [vmem:[#allocation9 + $0x3c] sm:$0xf]
        %v739 = vld [vmem:[#allocation3 + $0x8] sm:$0x1]
        %s740 = scalar_lea.vmem [#allocation9], 64
        %v741 = vld [vmem:[%s740] sm:$0xf]
        %v742 = vld [vmem:[%s740 + $0x4] sm:$0xf]
        %v743 = vld [vmem:[%s740 + $0x8] sm:$0xf]
        %v744 = vld [vmem:[%s740 + $0xc] sm:$0xf]
        %v745 = vld [vmem:[%s740 + $0x10] sm:$0xf]
        %v746 = vld [vmem:[%s740 + $0x14] sm:$0xf]
        %v747 = vld [vmem:[%s740 + $0x18] sm:$0xf]
        %v748 = vld [vmem:[%s740 + $0x1c] sm:$0xf]
        %v749 = vld [vmem:[%s740 + $0x20] sm:$0xf]
        %v750 = vld [vmem:[%s740 + $0x24] sm:$0xf]
        %v751 = vld [vmem:[%s740 + $0x28] sm:$0xf]
        %v752 = vld [vmem:[%s740 + $0x2c] sm:$0xf]
        %v753 = vld [vmem:[%s740 + $0x30] sm:$0xf]
        %v754 = vld [vmem:[%s740 + $0x34] sm:$0xf]
        %v755 = vld [vmem:[%s740 + $0x38] sm:$0xf]
        %v756 = vld [vmem:[%s740 + $0x3c] sm:$0xf]
        %v760 = vunpack.c.l.b16 %v721
        %v761 = vunpack.c.l.b16 %v722
        %v762 = vunpack.c.l.b16 %v739
        %v763 = vpack.c.b16 %v761, %v760
        %v764 = vpack.c.b16 %v762, %v762
        %v766 = vshrl.u32 %v763, 16
        %v768 = vshll.u32 %v763, 16
        %v770 = vrot.slane %v768, 1
        %v771 = vor.u32 %v766, %v770
        %v773 = vshll.u32 %v764, 16
        %v775 = vrot.slane %v773, 1
        %v776 = vsel %vm367, %v771, %v775
        %v794 = vunpack.c.l.b16 %v741
        %v795 = vunpack.c.l.b16 %v742
        %v796 = vunpack.c.l.b16 %v743
        %v797 = vunpack.c.l.b16 %v744
        %v798 = vunpack.c.l.b16 %v745
        %v799 = vunpack.c.l.b16 %v746
        %v800 = vunpack.c.l.b16 %v747
        %v801 = vunpack.c.l.b16 %v748
        %v802 = vunpack.c.l.b16 %v749
        %v803 = vunpack.c.l.b16 %v750
        %v804 = vunpack.c.l.b16 %v751
        %v805 = vunpack.c.l.b16 %v752
        %v806 = vunpack.c.l.b16 %v753
        %v807 = vunpack.c.l.b16 %v754
        %v808 = vunpack.c.l.b16 %v755
        %v809 = vunpack.c.l.b16 %v756
        %v810 = vpack.c.b16 %v795, %v794
        %v811 = vpack.c.b16 %v797, %v796
        %v812 = vpack.c.b16 %v799, %v798
        %v813 = vpack.c.b16 %v801, %v800
        %v814 = vpack.c.b16 %v803, %v802
        %v815 = vpack.c.b16 %v805, %v804
        %v816 = vpack.c.b16 %v807, %v806
        %v817 = vpack.c.b16 %v809, %v808
        %826 = vmatprep.subr.bf16.mxu0 0
        %827 = vmatpush1.bf16.msra.mxu0 %v810
        %828 = vmatprep.subr.bf16.mxu0 0
        %829 = vmatpush1.bf16.msra.mxu0 %v811
        %830 = vmatprep.subr.bf16.mxu0 0
        %831 = vmatpush1.bf16.msra.mxu0 %v812
        %832 = vmatprep.subr.bf16.mxu0 0
        %833 = vmatpush1.bf16.msra.mxu0 %v813
        %834 = vmatprep.subr.bf16.mxu0 0
        %835 = vmatpush1.bf16.msra.mxu0 %v814
        %836 = vmatprep.subr.bf16.mxu0 0
        %837 = vmatpush1.bf16.msra.mxu0 %v815
        %838 = vmatprep.subr.bf16.mxu0 0
        %839 = vmatpush1.bf16.msra.mxu0 %v816
        %840 = vmatprep.subr.bf16.mxu0 0
        %841 = vmatpush1.bf16.msra.mxu0 %v817
        %842 = vmatprep.subr.bf16.mxu0 0
        %843 = vmatpush1.bf16.msra.mxu0 0
        %844 = vmatprep.subr.bf16.mxu0 0
        %845 = vmatpush1.bf16.msra.mxu0 0
        %846 = vmatprep.subr.bf16.mxu0 0
        %847 = vmatpush1.bf16.msra.mxu0 0
        %848 = vmatprep.subr.bf16.mxu0 0
        %849 = vmatpush1.bf16.msra.mxu0 0
        %850 = vmatprep.subr.bf16.mxu0 0
        %851 = vmatpush1.bf16.msra.mxu0 0
        %852 = vmatprep.subr.bf16.mxu0 0
        %853 = vmatpush1.bf16.msra.mxu0 0
        %854 = vmatprep.subr.bf16.mxu0 0
        %855 = vmatpush1.bf16.msra.mxu0 0
        %856 = vmatprep.subr.bf16.mxu0 0
        %857 = vmatpush1.bf16.msra.mxu0 0
        %858 = vmatprep.mubr.bf16.mxu0 0
        %859 = vmatmul.mubr.bf16.gmra.mrb[0].mxu0 %v776
        %v860 = vpop.f32.mrb[0].mxu0
        %v861 = vadd.f32 0.0, %v860
        %v862 = vpop.f32.mrb[0].mxu0
        %v863 = vpop.f32.mrb[0].mxu0
        %v864 = vadd.f32 0.0, %v863
        %v865 = vpop.f32.mrb[0].mxu0
        %866 = vdwg.mxu0
        %v884 = vunpack.c.l.b16 %v723
        %v885 = vunpack.c.l.b16 %v724
        %v886 = vunpack.c.l.b16 %v725
        %v887 = vunpack.c.l.b16 %v726
        %v888 = vunpack.c.l.b16 %v727
        %v889 = vunpack.c.l.b16 %v728
        %v890 = vunpack.c.l.b16 %v729
        %v891 = vunpack.c.l.b16 %v730
        %v892 = vunpack.c.l.b16 %v731
        %v893 = vunpack.c.l.b16 %v732
        %v894 = vunpack.c.l.b16 %v733
        %v895 = vunpack.c.l.b16 %v734
        %v896 = vunpack.c.l.b16 %v735
        %v897 = vunpack.c.l.b16 %v736
        %v898 = vunpack.c.l.b16 %v737
        %v899 = vunpack.c.l.b16 %v738
        %v900 = vpack.c.b16 %v885, %v884
        %v901 = vpack.c.b16 %v887, %v886
        %v902 = vpack.c.b16 %v889, %v888
        %v903 = vpack.c.b16 %v891, %v890
        %v904 = vpack.c.b16 %v893, %v892
        %v905 = vpack.c.b16 %v895, %v894
        %v906 = vpack.c.b16 %v897, %v896
        %v907 = vpack.c.b16 %v899, %v898
        %916 = vmatprep.subr.bf16.mxu0 0
        %917 = vmatpush1.bf16.msra.mxu0 %v900
        %918 = vmatprep.subr.bf16.mxu0 0
        %919 = vmatpush1.bf16.msra.mxu0 %v901
        %920 = vmatprep.subr.bf16.mxu0 0
        %921 = vmatpush1.bf16.msra.mxu0 %v902
        %922 = vmatprep.subr.bf16.mxu0 0
        %923 = vmatpush1.bf16.msra.mxu0 %v903
        %924 = vmatprep.subr.bf16.mxu0 0
        %925 = vmatpush1.bf16.msra.mxu0 %v904
        %926 = vmatprep.subr.bf16.mxu0 0
        %927 = vmatpush1.bf16.msra.mxu0 %v905
        %928 = vmatprep.subr.bf16.mxu0 0
        %929 = vmatpush1.bf16.msra.mxu0 %v906
        %930 = vmatprep.subr.bf16.mxu0 0
        %931 = vmatpush1.bf16.msra.mxu0 %v907
        %932 = vmatprep.subr.bf16.mxu0 0
        %933 = vmatpush1.bf16.msra.mxu0 0
        %934 = vmatprep.subr.bf16.mxu0 0
        %935 = vmatpush1.bf16.msra.mxu0 0
        %936 = vmatprep.subr.bf16.mxu0 0
        %937 = vmatpush1.bf16.msra.mxu0 0
        %938 = vmatprep.subr.bf16.mxu0 0
        %939 = vmatpush1.bf16.msra.mxu0 0
        %940 = vmatprep.subr.bf16.mxu0 0
        %941 = vmatpush1.bf16.msra.mxu0 0
        %942 = vmatprep.subr.bf16.mxu0 0
        %943 = vmatpush1.bf16.msra.mxu0 0
        %944 = vmatprep.subr.bf16.mxu0 0
        %945 = vmatpush1.bf16.msra.mxu0 0
        %946 = vmatprep.subr.bf16.mxu0 0
        %947 = vmatpush1.bf16.msra.mxu0 0
        %948 = vmatprep.mubr.bf16.mxu0 0
        %949 = vmatmul.mubr.bf16.gmra.mrb[0].mxu0 %v763
        %v950 = vpop.f32.mrb[0].mxu0
        %v951 = vadd.f32 %v861, %v950
        %v952 = vpop.f32.mrb[0].mxu0
        %v953 = vpop.f32.mrb[0].mxu0
        %v954 = vadd.f32 %v864, %v953
        %v955 = vpop.f32.mrb[0].mxu0
        %956 = vdwg.mxu0
        %v957 = vld [vmem:[#allocation3] sm:$0xe]
        %s958 = scalar_lea.vmem [#allocation9], 128
        %v959 = vld [vmem:[%s958] sm:$0xf]
        %v960 = vld [vmem:[%s958 + $0x4] sm:$0xf]
        %v961 = vld [vmem:[%s958 + $0x8] sm:$0xf]
        %v962 = vld [vmem:[%s958 + $0xc] sm:$0xf]
        %v963 = vld [vmem:[%s958 + $0x10] sm:$0xf]
        %v964 = vld [vmem:[%s958 + $0x14] sm:$0xf]
        %v965 = vld [vmem:[%s958 + $0x18] sm:$0xf]
        %v966 = vld [vmem:[%s958 + $0x1c] sm:$0xf]
        %v967 = vld [vmem:[%s958 + $0x20] sm:$0xf]
        %v968 = vld [vmem:[%s958 + $0x24] sm:$0xf]
        %v969 = vld [vmem:[%s958 + $0x28] sm:$0xf]
        %v970 = vld [vmem:[%s958 + $0x2c] sm:$0xf]
        %v971 = vld [vmem:[%s958 + $0x30] sm:$0xf]
        %v972 = vld [vmem:[%s958 + $0x34] sm:$0xf]
        %v973 = vld [vmem:[%s958 + $0x38] sm:$0xf]
        %v974 = vld [vmem:[%s958 + $0x3c] sm:$0xf]
        %v976 = vunpack.c.l.b16 %v957
        %v977 = vpack.c.b16 %v761, %v976
        %v978 = vrot.slane %v977, 1
        %v979 = vrot.slane %v764, 1
        %v980 = vsel %vm581, %v978, %v979
        %v998 = vunpack.c.l.b16 %v959
        %v999 = vunpack.c.l.b16 %v960
        %v1000 = vunpack.c.l.b16 %v961
        %v1001 = vunpack.c.l.b16 %v962
        %v1002 = vunpack.c.l.b16 %v963
        %v1003 = vunpack.c.l.b16 %v964
        %v1004 = vunpack.c.l.b16 %v965
        %v1005 = vunpack.c.l.b16 %v966
        %v1006 = vunpack.c.l.b16 %v967
        %v1007 = vunpack.c.l.b16 %v968
        %v1008 = vunpack.c.l.b16 %v969
        %v1009 = vunpack.c.l.b16 %v970
        %v1010 = vunpack.c.l.b16 %v971
        %v1011 = vunpack.c.l.b16 %v972
        %v1012 = vunpack.c.l.b16 %v973
        %v1013 = vunpack.c.l.b16 %v974
        %v1014 = vpack.c.b16 %v999, %v998
        %v1015 = vpack.c.b16 %v1001, %v1000
        %v1016 = vpack.c.b16 %v1003, %v1002
        %v1017 = vpack.c.b16 %v1005, %v1004
        %v1018 = vpack.c.b16 %v1007, %v1006
        %v1019 = vpack.c.b16 %v1009, %v1008
        %v1020 = vpack.c.b16 %v1011, %v1010
        %v1021 = vpack.c.b16 %v1013, %v1012
        %1030 = vmatprep.subr.bf16.mxu0 0
        %1031 = vmatpush1.bf16.msra.mxu0 %v1014
        %1032 = vmatprep.subr.bf16.mxu0 0
        %1033 = vmatpush1.bf16.msra.mxu0 %v1015
        %1034 = vmatprep.subr.bf16.mxu0 0
        %1035 = vmatpush1.bf16.msra.mxu0 %v1016
        %1036 = vmatprep.subr.bf16.mxu0 0
        %1037 = vmatpush1.bf16.msra.mxu0 %v1017
        %1038 = vmatprep.subr.bf16.mxu0 0
        %1039 = vmatpush1.bf16.msra.mxu0 %v1018
        %1040 = vmatprep.subr.bf16.mxu0 0
        %1041 = vmatpush1.bf16.msra.mxu0 %v1019
        %1042 = vmatprep.subr.bf16.mxu0 0
        %1043 = vmatpush1.bf16.msra.mxu0 %v1020
        %1044 = vmatprep.subr.bf16.mxu0 0
        %1045 = vmatpush1.bf16.msra.mxu0 %v1021
        %1046 = vmatprep.subr.bf16.mxu0 0
        %1047 = vmatpush1.bf16.msra.mxu0 0
        %1048 = vmatprep.subr.bf16.mxu0 0
        %1049 = vmatpush1.bf16.msra.mxu0 0
        %1050 = vmatprep.subr.bf16.mxu0 0
        %1051 = vmatpush1.bf16.msra.mxu0 0
        %1052 = vmatprep.subr.bf16.mxu0 0
        %1053 = vmatpush1.bf16.msra.mxu0 0
        %1054 = vmatprep.subr.bf16.mxu0 0
        %1055 = vmatpush1.bf16.msra.mxu0 0
        %1056 = vmatprep.subr.bf16.mxu0 0
        %1057 = vmatpush1.bf16.msra.mxu0 0
        %1058 = vmatprep.subr.bf16.mxu0 0
        %1059 = vmatpush1.bf16.msra.mxu0 0
        %1060 = vmatprep.subr.bf16.mxu0 0
        %1061 = vmatpush1.bf16.msra.mxu0 0
        %1062 = vmatprep.mubr.bf16.mxu0 0
        %1063 = vmatmul.mubr.bf16.gmra.mrb[0].mxu0 %v980
        %v1064 = vpop.f32.mrb[0].mxu0
        %v1065 = vadd.f32 0.0, %v1064
        %v1066 = vpop.f32.mrb[0].mxu0
        %v1067 = vpop.f32.mrb[0].mxu0
        %v1068 = vadd.f32 0.0, %v1067
        %v1069 = vpop.f32.mrb[0].mxu0
        %1070 = vdwg.mxu0
        %v1071 = vadd.f32 %v951, %v1065
        %v1072 = vadd.f32 %v954, %v1068
        %v1073 = vld [vmem:[%s4] sm:$0x1]
        %v1075 = vlaneseq
        %v1076 = vshrl.u32 %v1075, 7
        %v1077 = vsub.s32 0, %v1076
        %v1078 = vrot.slane %v1073, %v1077
        %v1080 = vadd.f32 %v1071, %v1078
        %v1081 = vadd.f32 %v1072, %v1078
        %v1082 = vunpack.c.l.bf16 %v290
        %v1083 = vunpack.c.l.bf16 %v291
        %v1084 = vadd.f32 %v1080, %v1082
        %v1085 = vadd.f32 %v1081, %v1083
        %v1086 = vmax.f32 %v1084, 0.0
        %v1087 = vmax.f32 %v1085, 0.0
        %1088 = vst [vmem:[%s271] sm:$0xff] %v1086
        %1089 = vst [vmem:[%s271 + $0x8] sm:$0xff] %v1087
        %s1090 = sand.u32 %s141, 1
        %s1091 = scalar_lea.sflag [#allocation6], %s1090
        %s1092 = sand.u32 %s141, 1
        %s1093 = smul.addr %s1092, 16
        %s1094 = scalar_lea.vmem [#allocation10], %s1093
        // Predicated region
        $region53: #{tpu_custom_call.1} parent=39 // pred_check
          %p1095 = pneg %p151
        $region54: #{tpu_custom_call.1} parent=39 // pred_check_branch
          %1097 = sbr.rel (%p1095) target = $region56
        $region55: #{tpu_custom_call.1} parent=39 // pred_region
          %s1099 = ssub.s32 256, 256
          %1100 = vsyncadd %s1091, %s1099
          %s1101 = smul.addr %s23, 2
          %s1102 = smul.addr %s1101, 128
          %s1103 = scalar_lea.hbm %s5, %s1102
          %s1104 = sshll.u32 %s1094, 4
          %s1105 = int_to_ptr.vmem [resolvable:$true] %s1104
          %1110 = dma.vmem_to_hbm [thread:$0]  %s1105, 256, %s1103, %s1091, 128, 128, 8
        $region56: #{tpu_custom_call.1} parent=39 // pred_fallthru
          _
      $region40: #{tpu_custom_call.1} parent=5 // pred_fallthru
        _
      %p1111 = scmp.le.s32.totalorder 2, %s18
      // Predicated region
      $region57: #{tpu_custom_call.1} parent=5 // pred_check
        %p1112 = pneg %p1111
      $region58: #{tpu_custom_call.1} parent=5 // pred_check_branch
        %1114 = sbr.rel (%p1112) target = $region60
      $region59: #{tpu_custom_call.1} parent=5 // pred_region
        %s1115 = ssub.s32 %s18, 2
        // Predicated region
        $region61: #{tpu_custom_call.1} parent=59 // pred_check
          %p1116 = pneg %p157
        $region62: #{tpu_custom_call.1} parent=59 // pred_check_branch
          %1118 = sbr.rel (%p1116) target = $region64
        $region63: #{tpu_custom_call.1} parent=59 // pred_region
          %s1119 = sand.u32 %s142, 1
          %s1120 = scalar_lea.sflag [#allocation6], %s1119
          %s1121 = sand.u32 %s142, 1
          %s1122 = smul.addr %s1121, 16
          %s1123 = scalar_lea.vmem [#allocation10], %s1122
          %1124 = dma.done %s1120, 256
        $region64: #{tpu_custom_call.1} parent=59 // pred_fallthru
          _
      $region60: #{tpu_custom_call.1} parent=5 // pred_fallthru
        _
    $region6: #{tpu_custom_call.1} parent=1 // loop_footer
      %s22 = sadd.s32 1, %s18
    $region7: #{tpu_custom_call.1} parent=1 // loop_footer_branch
      %17 = sbr.rel target = $region3
    $region8: #{tpu_custom_call.1} parent=1 // loop_exit
      _
    %1125 = vsyncpa [#allocation5], 1
    %s1126 = scalar_lea.sflag [#allocation5], 1
    %1127 = vsyncpa %s1126, 1
    %1128 = vsyncpa [#allocation8], 1
    %1129 = vsyncpa [#allocation6], 1
    %s1130 = scalar_lea.sflag [#allocation6], 1
    %1131 = vsyncpa %s1130, 1

</llo_original>
